<compile_context>
chip_gen: v7x
topology: tpu7x:2x2x1
jax: 0.10.0
libtpu: 0.0.40
codegen_flags: <defaults>
</compile_context>

<pallas_src>
import functools

import jax
import jax.numpy as jnp
from jax.experimental import pallas as pl
from jax.experimental.pallas import tpu as pltpu


def _fused_mlp_kernel(x_ref, w1_ref, b1_ref, w2_ref, b2_ref,
                      w3_ref, b3_ref, w4_ref, b4_ref, o_ref, acc_ref, *, din):
    """Grid = (batch_tiles, k_tiles). fc1 accumulates over K; the epilogue
    (ReLU -> fc2 -> ReLU -> fc3 -> ReLU -> fc4) runs once on the last K step."""
    k = pl.program_id(1)
    nk = pl.num_programs(1)
    tk = x_ref.shape[-1]

    @pl.when(k == 0)
    def _init():
        # Fold fc1 bias into accumulator initialization (saves an epilogue add).
        acc_ref[...] = jnp.broadcast_to(b1_ref[...], acc_ref.shape)

    x_blk = x_ref[...]          # f32 block straight from HBM (cast below, on VPU)
    w_blk = w1_ref[...]         # bf16 block

    if din % tk != 0:
        # Static (trace-time) branch: only emit masking when Din is ragged.
        # Mask both sides so OOB garbage (possibly NaN/Inf) never reaches the MXU.
        limit = din - k * tk
        col_ids = jax.lax.broadcasted_iota(jnp.int32, x_blk.shape, dimension=1)
        x_blk = jnp.where(col_ids < limit, x_blk, 0.0)
        row_ids = jax.lax.broadcasted_iota(jnp.int32, w_blk.shape, dimension=0)
        w_blk = jnp.where(row_ids < limit, w_blk, jnp.zeros_like(w_blk))

    # fc1 partial product: bf16 x bf16 on the MXU, f32 accumulation.
    acc_ref[...] += jnp.dot(x_blk.astype(jnp.bfloat16), w_blk,
                            preferred_element_type=jnp.float32)

    @pl.when(k == nk - 1)
    def _epilogue():
        bf16 = jnp.bfloat16
        h = jnp.maximum(acc_ref[...], 0.0)                       # fc1 ReLU (f32)
        # fc2
        h = jnp.dot(h.astype(bf16), w2_ref[...],
                    preferred_element_type=jnp.float32) + b2_ref[...]
        h = jnp.maximum(h, 0.0)
        # fc3
        h = jnp.dot(h.astype(bf16), w3_ref[...],
                    preferred_element_type=jnp.float32) + b3_ref[...]
        h = jnp.maximum(h, 0.0)
        # fc4 (no ReLU)
        h = jnp.dot(h.astype(bf16), w4_ref[...],
                    preferred_element_type=jnp.float32) + b4_ref[...]
        o_ref[...] = h.astype(o_ref.dtype)


def denoising_mlp_forward(x, params, *, tk=8192, tb=256):
    """x: (B, Din) f32.  params: [(w_i (in,out) bf16, b_i (1,out) f32)] * 4.
    Returns (B, output_size) f32.  Dropout is treated as identity (eval mode)."""
    (w1, b1), (w2, b2), (w3, b3), (w4, b4) = params
    B, din = x.shape
    H, H2, O = w1.shape[1], w2.shape[1], w4.shape[1]

    # ---- reduction (Din) tile: lane-aligned; ragged tail handled in-kernel ----
    tk = max(128, (int(tk) // 128) * 128)
    tk = min(tk, pl.cdiv(din, 128) * 128)
    nk = pl.cdiv(din, tk)

    # ---- batch tile: full batch when small, else cdiv grid with tb rows ----
    if B <= tb:
        tb = B                      # full-extent block is always layout-legal
    nb = pl.cdiv(B, tb)

    # Scoped-VMEM budget: double-buffered x (f32) + w1 (bf16, lane-padded 32->128)
    # + accumulator / output / resident small weights, with ~30% headroom.
    vmem_limit = int(1.3 * (2 * tb * tk * 4          # x blocks (f32)
                            + 2 * tk * 128 * 2       # w1 blocks (bf16, lane-padded)
                            + 4 * tb * 128 * 4))     # acc + out (lane-padded)
    vmem_limit = max(vmem_limit + (2 << 20), 16 << 20)

    flops = 2 * B * (din * H + H * H2 + H2 * H + H * O)
    bytes_accessed = (B * din * 4            # x stream (f32)
                      + din * H * 2          # w1 stream (bf16)
                      + B * O * 4            # output
                      + 2 * (H * H2 + H2 * H + H * O))

    kernel = functools.partial(_fused_mlp_kernel, din=din)

    return pl.pallas_call(
        kernel,
        out_shape=jax.ShapeDtypeStruct((B, O), jnp.float32),
        grid=(nb, nk),
        in_specs=[
            pl.BlockSpec((tb, tk), lambda b, k: (b, k)),   # x   (f32, streamed)
            pl.BlockSpec((tk, H), lambda b, k: (k, 0)),    # w1  (bf16, streamed)
            pl.BlockSpec((1, H), lambda b, k: (0, 0)),     # b1  (resident)
            pl.BlockSpec((H, H2), lambda b, k: (0, 0)),    # w2  (resident)
            pl.BlockSpec((1, H2), lambda b, k: (0, 0)),    # b2
            pl.BlockSpec((H2, H), lambda b, k: (0, 0)),    # w3
            pl.BlockSpec((1, H), lambda b, k: (0, 0)),     # b3
            pl.BlockSpec((H, O), lambda b, k: (0, 0)),     # w4
            pl.BlockSpec((1, O), lambda b, k: (0, 0)),     # b4
        ],
        out_specs=pl.BlockSpec((tb, O), lambda b, k: (b, 0)),
        scratch_shapes=[pltpu.VMEM((tb, H), jnp.float32)],  # fc1 accumulator
        compiler_params=pltpu.CompilerParams(
            dimension_semantics=("parallel", "arbitrary"),
            vmem_limit_bytes=vmem_limit,
        ),
        cost_estimate=pl.CostEstimate(flops=flops, transcendentals=0,
                                      bytes_accessed=bytes_accessed),
    )(x, w1, b1, w2, b2, w3, b3, w4, b4)


def init_params(key, input_size, hidden_size, output_size):
    """PyTorch-style uniform fan-in init.  Weights stored (in, out) in bf16;
    biases stored (1, out) in f32 (pre-broadcast shape, no per-call reshape)."""
    dims = [
        (input_size, hidden_size),        # fc1
        (hidden_size, hidden_size * 2),   # fc2
        (hidden_size * 2, hidden_size),   # fc3
        (hidden_size, output_size),       # fc4
    ]
    params = []
    for fan_in, fan_out in dims:
        key, kw, kb = jax.random.split(key, 3)
        bound = 1.0 / (fan_in ** 0.5)
        w = jax.random.uniform(kw, (fan_in, fan_out), jnp.float32, -bound, bound)
        b = jax.random.uniform(kb, (1, fan_out), jnp.float32, -bound, bound)
        params.append((w.astype(jnp.bfloat16), b))
    return params


def reference_forward(x, params):
    """Plain-JAX reference emulating the kernel numerics:
    bf16 matmul inputs, f32 accumulation, f32 bias/ReLU, dropout = identity."""
    f32 = jnp.float32
    (w1, b1), (w2, b2), (w3, b3), (w4, b4) = params

    def bdot(a, w):
        return jnp.dot(a.astype(jnp.bfloat16).astype(f32), w.astype(f32),
                       precision=jax.lax.Precision.HIGHEST)

    h = jnp.maximum(bdot(x, w1) + b1, 0.0)
    h = jnp.maximum(bdot(h, w2) + b2, 0.0)
    h = jnp.maximum(bdot(h, w3) + b3, 0.0)
    return bdot(h, w4) + b4


if __name__ == "__main__":
    # Small shapes consistent with the module (real model: input_size=80601).
    # input_size=1000 with tk=256 exercises the ragged-K masking path
    # (4 K steps, last tile has 232 valid columns).
    hidden_size = 32
    output_size = 16
    input_size = 1000

    key = jax.random.PRNGKey(0)
    kx, kx2, kp = jax.random.split(key, 3)
    params = init_params(kp, input_size, hidden_size, output_size)

    # Case 1: batch=8 (single full-extent batch tile), ragged Din.
    x = jax.random.normal(kx, (8, input_size), jnp.float32)
    fwd = jax.jit(functools.partial(denoising_mlp_forward, tk=256))
    out = jax.block_until_ready(fwd(x, params))
    ref = reference_forward(x, params)
    assert out.shape == (8, output_size)
    assert jnp.allclose(out, ref, atol=2e-3, rtol=2e-3), \
        f"case1 max abs diff = {float(jnp.max(jnp.abs(out - ref)))}"

    # Case 2: batch=20 with tb=8 exercises the ragged (cdiv) batch grid path.
    x2 = jax.random.normal(kx2, (20, input_size), jnp.float32)
    fwd2 = jax.jit(functools.partial(denoising_mlp_forward, tk=256, tb=8))
    out2 = jax.block_until_ready(fwd2(x2, params))
    ref2 = reference_forward(x2, params)
    assert out2.shape == (20, output_size)
    assert jnp.allclose(out2, ref2, atol=2e-3, rtol=2e-3), \
        f"case2 max abs diff = {float(jnp.max(jnp.abs(out2 - ref2)))}"

    print("KERNEL_OK")
</pallas_src>

<mosaic_0001>
module attributes {stable_mosaic.version = 11 : i64} {
  func.func @_fused_mlp_kernel(%arg0: i32, %arg1: i32, %arg2: memref<8x256xf32, #tpu.memory_space<vmem>>, %arg3: memref<256x32xbf16, #tpu.memory_space<vmem>>, %arg4: memref<1x32xf32, #tpu.memory_space<vmem>>, %arg5: memref<32x64xbf16, #tpu.memory_space<vmem>>, %arg6: memref<1x64xf32, #tpu.memory_space<vmem>>, %arg7: memref<64x32xbf16, #tpu.memory_space<vmem>>, %arg8: memref<1x32xf32, #tpu.memory_space<vmem>>, %arg9: memref<32x16xbf16, #tpu.memory_space<vmem>>, %arg10: memref<1x16xf32, #tpu.memory_space<vmem>>, %arg11: memref<8x16xf32, #tpu.memory_space<vmem>>, %arg12: memref<8x32xf32, #tpu.memory_space<vmem>>) attributes {dimension_semantics = [#tpu.dimension_semantics<parallel>, #tpu.dimension_semantics<arbitrary>], iteration_bounds = array<i64: 1, 4>, scalar_prefetch = 0 : i64, scratch_operands = 1 : i64, tpu.core_type = #tpu.core_type<tc>, window_params = [{transform_indices = @transform_0, window_bounds = array<i64: 8, 256>}, {transform_indices = @transform_1, window_bounds = array<i64: 256, 32>}, {pipeline_mode = #tpu.pipeline_mode<synchronous>, transform_indices = @transform_2, window_bounds = array<i64: 1, 32>}, {pipeline_mode = #tpu.pipeline_mode<synchronous>, transform_indices = @transform_3, window_bounds = array<i64: 32, 64>}, {pipeline_mode = #tpu.pipeline_mode<synchronous>, transform_indices = @transform_4, window_bounds = array<i64: 1, 64>}, {pipeline_mode = #tpu.pipeline_mode<synchronous>, transform_indices = @transform_5, window_bounds = array<i64: 64, 32>}, {pipeline_mode = #tpu.pipeline_mode<synchronous>, transform_indices = @transform_6, window_bounds = array<i64: 1, 32>}, {pipeline_mode = #tpu.pipeline_mode<synchronous>, transform_indices = @transform_7, window_bounds = array<i64: 32, 16>}, {pipeline_mode = #tpu.pipeline_mode<synchronous>, transform_indices = @transform_8, window_bounds = array<i64: 1, 16>}, {transform_indices = @transform_9, window_bounds = array<i64: 8, 16>}]} {
    %c0_i32 = arith.constant 0 : i32
    %0 = arith.cmpi eq, %arg1, %c0_i32 : i32
    %1 = arith.extui %0 : i1 to i32
    %c0_i32_0 = arith.constant 0 : i32
    %2 = arith.cmpi ne, %1, %c0_i32_0 : i32
    scf.if %2 {
      %c0_11 = arith.constant 0 : index
      %c0_12 = arith.constant 0 : index
      %25 = vector.load %arg4[%c0_11, %c0_12] : memref<1x32xf32, #tpu.memory_space<vmem>>, vector<1x32xf32>
      %26 = vector.shape_cast %25 : vector<1x32xf32> to vector<1x32xf32>
      %27 = vector.broadcast %26 : vector<1x32xf32> to vector<8x32xf32>
      %c0_13 = arith.constant 0 : index
      %c0_14 = arith.constant 0 : index
      %28 = vector.load %arg12[%c0_13, %c0_14] : memref<8x32xf32, #tpu.memory_space<vmem>>, vector<8x32xf32>
      tpu.vector_store %arg12[%c0_13, %c0_14], %27 {strides = array<i32>} : memref<8x32xf32, #tpu.memory_space<vmem>>, vector<8x32xf32>,
    } else {
    }
    %c0 = arith.constant 0 : index
    %c0_1 = arith.constant 0 : index
    %3 = vector.load %arg2[%c0, %c0_1] : memref<8x256xf32, #tpu.memory_space<vmem>>, vector<8x256xf32>
    %c0_2 = arith.constant 0 : index
    %c0_3 = arith.constant 0 : index
    %4 = vector.load %arg3[%c0_2, %c0_3] : memref<256x32xbf16, #tpu.memory_space<vmem>>, vector<256x32xbf16>
    %c256_i32 = arith.constant 256 : i32
    %5 = arith.muli %arg1, %c256_i32 : i32
    %c1000_i32 = arith.constant 1000 : i32
    %6 = arith.subi %c1000_i32, %5 : i32
    %7 = tpu.iota {dimensions = array<i32: 1>} : vector<8x256xi32>
    %8 = vector.broadcast %6 : i32 to vector<8x256xi32>
    %9 = arith.cmpi slt, %7, %8 : vector<8x256xi32>
    %cst = arith.constant 0.000000e+00 : f32
    %10 = vector.broadcast %cst : f32 to vector<8x256xf32>
    %11 = arith.select %9, %3, %10 : vector<8x256xi1>, vector<8x256xf32>
    %12 = tpu.iota {dimensions = array<i32: 0>} : vector<256x32xi32>
    %13 = vector.broadcast %6 : i32 to vector<256x32xi32>
    %14 = arith.cmpi slt, %12, %13 : vector<256x32xi32>
    %cst_4 = arith.constant 0.000000e+00 : bf16
    %15 = vector.broadcast %cst_4 : bf16 to vector<256x32xbf16>
    %16 = arith.select %14, %4, %15 : vector<256x32xi1>, vector<256x32xbf16>
    %c0_5 = arith.constant 0 : index
    %c0_6 = arith.constant 0 : index
    %17 = vector.load %arg12[%c0_5, %c0_6] : memref<8x32xf32, #tpu.memory_space<vmem>>, vector<8x32xf32>
    %18 = arith.truncf %11 : vector<8x256xf32> to vector<8x256xbf16>
    %cst_7 = arith.constant dense<0.000000e+00> : vector<8x32xf32>
    %19 = tpu.matmul %18, %16, %cst_7 {dimension_numbers = #tpu.dot_dimension_numbers<[1], [0], [0], [1], [0, 0, 1, 1], [], []>} : vector<8x256xbf16>, vector<256x32xbf16>, vector<8x32xf32> -> vector<8x32xf32>
    %20 = arith.addf %17, %19 : vector<8x32xf32>
    %c0_8 = arith.constant 0 : index
    %c0_9 = arith.constant 0 : index
    %21 = vector.load %arg12[%c0_8, %c0_9] : memref<8x32xf32, #tpu.memory_space<vmem>>, vector<8x32xf32>
    tpu.vector_store %arg12[%c0_8, %c0_9], %20 {strides = array<i32>} : memref<8x32xf32, #tpu.memory_space<vmem>>, vector<8x32xf32>,
    %c3_i32 = arith.constant 3 : i32
    %22 = arith.cmpi eq, %arg1, %c3_i32 : i32
    %23 = arith.extui %22 : i1 to i32
    %c0_i32_10 = arith.constant 0 : i32
    %24 = arith.cmpi ne, %23, %c0_i32_10 : i32
    scf.if %24 {
      %c0_11 = arith.constant 0 : index
      %c0_12 = arith.constant 0 : index
      %25 = vector.load %arg12[%c0_11, %c0_12] : memref<8x32xf32, #tpu.memory_space<vmem>>, vector<8x32xf32>
      %cst_13 = arith.constant 0.000000e+00 : f32
      %26 = vector.broadcast %cst_13 : f32 to vector<8x32xf32>
      %27 = arith.maximumf %25, %26 : vector<8x32xf32>
      %28 = arith.truncf %27 : vector<8x32xf32> to vector<8x32xbf16>
      %c0_14 = arith.constant 0 : index
      %c0_15 = arith.constant 0 : index
      %29 = vector.load %arg5[%c0_14, %c0_15] : memref<32x64xbf16, #tpu.memory_space<vmem>>, vector<32x64xbf16>
      %cst_16 = arith.constant dense<0.000000e+00> : vector<8x64xf32>
      %30 = tpu.matmul %28, %29, %cst_16 {dimension_numbers = #tpu.dot_dimension_numbers<[1], [0], [0], [1], [0, 0, 1, 1], [], []>} : vector<8x32xbf16>, vector<32x64xbf16>, vector<8x64xf32> -> vector<8x64xf32>
      %c0_17 = arith.constant 0 : index
      %c0_18 = arith.constant 0 : index
      %31 = vector.load %arg6[%c0_17, %c0_18] : memref<1x64xf32, #tpu.memory_space<vmem>>, vector<1x64xf32>
      %32 = vector.broadcast %31 : vector<1x64xf32> to vector<8x64xf32>
      %33 = arith.addf %30, %32 : vector<8x64xf32>
      %cst_19 = arith.constant 0.000000e+00 : f32
      %34 = vector.broadcast %cst_19 : f32 to vector<8x64xf32>
      %35 = arith.maximumf %33, %34 : vector<8x64xf32>
      %36 = arith.truncf %35 : vector<8x64xf32> to vector<8x64xbf16>
      %c0_20 = arith.constant 0 : index
      %c0_21 = arith.constant 0 : index
      %37 = vector.load %arg7[%c0_20, %c0_21] : memref<64x32xbf16, #tpu.memory_space<vmem>>, vector<64x32xbf16>
      %cst_22 = arith.constant dense<0.000000e+00> : vector<8x32xf32>
      %38 = tpu.matmul %36, %37, %cst_22 {dimension_numbers = #tpu.dot_dimension_numbers<[1], [0], [0], [1], [0, 0, 1, 1], [], []>} : vector<8x64xbf16>, vector<64x32xbf16>, vector<8x32xf32> -> vector<8x32xf32>
      %c0_23 = arith.constant 0 : index
      %c0_24 = arith.constant 0 : index
      %39 = vector.load %arg8[%c0_23, %c0_24] : memref<1x32xf32, #tpu.memory_space<vmem>>, vector<1x32xf32>
      %40 = vector.broadcast %39 : vector<1x32xf32> to vector<8x32xf32>
      %41 = arith.addf %38, %40 : vector<8x32xf32>
      %cst_25 = arith.constant 0.000000e+00 : f32
      %42 = vector.broadcast %cst_25 : f32 to vector<8x32xf32>
      %43 = arith.maximumf %41, %42 : vector<8x32xf32>
      %44 = arith.truncf %43 : vector<8x32xf32> to vector<8x32xbf16>
      %c0_26 = arith.constant 0 : index
      %c0_27 = arith.constant 0 : index
      %45 = vector.load %arg9[%c0_26, %c0_27] : memref<32x16xbf16, #tpu.memory_space<vmem>>, vector<32x16xbf16>
      %cst_28 = arith.constant dense<0.000000e+00> : vector<8x16xf32>
      %46 = tpu.matmul %44, %45, %cst_28 {dimension_numbers = #tpu.dot_dimension_numbers<[1], [0], [0], [1], [0, 0, 1, 1], [], []>} : vector<8x32xbf16>, vector<32x16xbf16>, vector<8x16xf32> -> vector<8x16xf32>
      %c0_29 = arith.constant 0 : index
      %c0_30 = arith.constant 0 : index
      %47 = vector.load %arg10[%c0_29, %c0_30] : memref<1x16xf32, #tpu.memory_space<vmem>>, vector<1x16xf32>
      %48 = vector.broadcast %47 : vector<1x16xf32> to vector<8x16xf32>
      %49 = arith.addf %46, %48 : vector<8x16xf32>
      %c0_31 = arith.constant 0 : index
      %c0_32 = arith.constant 0 : index
      %50 = vector.load %arg11[%c0_31, %c0_32] : memref<8x16xf32, #tpu.memory_space<vmem>>, vector<8x16xf32>
      tpu.vector_store %arg11[%c0_31, %c0_32], %49 {strides = array<i32>} : memref<8x16xf32, #tpu.memory_space<vmem>>, vector<8x16xf32>,
    } else {
    }
    return
  }
  func.func @transform_0(%arg0: i32, %arg1: i32) -> (i32, i32) {
    %c0_i32 = arith.constant 0 : i32
    return %arg0, %arg1 : i32, i32
  }
  func.func @transform_1(%arg0: i32, %arg1: i32) -> (i32, i32) {
    %c0_i32 = arith.constant 0 : i32
    %c0_i32_0 = arith.constant 0 : i32
    return %arg1, %c0_i32 : i32, i32
  }
  func.func @transform_2(%arg0: i32, %arg1: i32) -> (i32, i32) {
    %c0_i32 = arith.constant 0 : i32
    %c0_i32_0 = arith.constant 0 : i32
    %c0_i32_1 = arith.constant 0 : i32
    return %c0_i32, %c0_i32_0 : i32, i32
  }
  func.func @transform_3(%arg0: i32, %arg1: i32) -> (i32, i32) {
    %c0_i32 = arith.constant 0 : i32
    %c0_i32_0 = arith.constant 0 : i32
    %c0_i32_1 = arith.constant 0 : i32
    return %c0_i32, %c0_i32_0 : i32, i32
  }
  func.func @transform_4(%arg0: i32, %arg1: i32) -> (i32, i32) {
    %c0_i32 = arith.constant 0 : i32
    %c0_i32_0 = arith.constant 0 : i32
    %c0_i32_1 = arith.constant 0 : i32
    return %c0_i32, %c0_i32_0 : i32, i32
  }
  func.func @transform_5(%arg0: i32, %arg1: i32) -> (i32, i32) {
    %c0_i32 = arith.constant 0 : i32
    %c0_i32_0 = arith.constant 0 : i32
    %c0_i32_1 = arith.constant 0 : i32
    return %c0_i32, %c0_i32_0 : i32, i32
  }
  func.func @transform_6(%arg0: i32, %arg1: i32) -> (i32, i32) {
    %c0_i32 = arith.constant 0 : i32
    %c0_i32_0 = arith.constant 0 : i32
    %c0_i32_1 = arith.constant 0 : i32
    return %c0_i32, %c0_i32_0 : i32, i32
  }
  func.func @transform_7(%arg0: i32, %arg1: i32) -> (i32, i32) {
    %c0_i32 = arith.constant 0 : i32
    %c0_i32_0 = arith.constant 0 : i32
    %c0_i32_1 = arith.constant 0 : i32
    return %c0_i32, %c0_i32_0 : i32, i32
  }
  func.func @transform_8(%arg0: i32, %arg1: i32) -> (i32, i32) {
    %c0_i32 = arith.constant 0 : i32
    %c0_i32_0 = arith.constant 0 : i32
    %c0_i32_1 = arith.constant 0 : i32
    return %c0_i32, %c0_i32_0 : i32, i32
  }
  func.func @transform_9(%arg0: i32, %arg1: i32) -> (i32, i32) {
    %c0_i32 = arith.constant 0 : i32
    %c0_i32_0 = arith.constant 0 : i32
    return %arg0, %c0_i32 : i32, i32
  }
}

</mosaic_0001>

<llo_original>
// kernel: denoising_mlp_forward.1
$region0: #{denoising_mlp_forward.1}
  #allocation0 [shape = 'u32[]', space=smem, size = 0x4, offset = 0x4, fixed_abs, tag = 'smem constant byte address 0x4 - core index']
  #allocation1 [shape = 'u32[144,128]{1,0:T(1,128)}', space=vmem, size = 0x12000, scoped, tag = 'internal scratch']
  #allocation2 [shape = 'f32[8,32]{1,0:T(8,128)}', space=vmem, size = 0x1000, scoped, tag = 'scratch operand']
  %s0 = inlined_call_operand.vmem [shape: f32[8,1000], index: 0, kind: input, shape index: {}]
  %s1 = inlined_call_operand.vmem [shape: bf16[1000,32], index: 1, kind: input, shape index: {}]
  %s2 = inlined_call_operand.vmem [shape: f32[1,32], index: 2, kind: input, shape index: {}]
  %s3 = inlined_call_operand.vmem [shape: bf16[32,64], index: 3, kind: input, shape index: {}]
  %s4 = inlined_call_operand.vmem [shape: f32[1,64], index: 4, kind: input, shape index: {}]
  %s5 = inlined_call_operand.vmem [shape: bf16[64,32], index: 5, kind: input, shape index: {}]
  %s6 = inlined_call_operand.vmem [shape: f32[1,32], index: 6, kind: input, shape index: {}]
  %s7 = inlined_call_operand.vmem [shape: bf16[32,16], index: 7, kind: input, shape index: {}]
  %s8 = inlined_call_operand.vmem [shape: f32[1,16], index: 8, kind: input, shape index: {}]
  %s9 = inlined_call_operand.hbm [shape: f32[8,16], index: 9, kind: output, shape index: {}]
  %s10 = sld [smem:[#allocation0]]
  $region77: #{denoising_mlp_forward.1} parent=0
    _
  %s12 = ssub.s32 1, %s10
  %s13 = scalar_select 0, %s12, %s10
  $region1: #{denoising_mlp_forward.1} parent=0
    #allocation3 [shape = 'u8[4096]{0}', space=vmem, size = 0x1000, scoped, tag = 'output window, operand 0, single buffered']
    #allocation4 [shape = 's32[2]{0}', space=sflag, size = 0x8, scoped, tag = 'scoped memory for denoising_mlp_forward.1']
    %14 = vsyncpa [#allocation4], 0
    loop: start=0, step=1, limit=6
    $region2: #{denoising_mlp_forward.1} parent=1 // loop_pre_header
      _
    $region3: #{denoising_mlp_forward.1} parent=1 // loop_header
      %s16 = sphi 0, %s20
      %p17 = scmp.ge.s32.totalorder %s16, 6
      %s23 = sphi 0, %s35
      %s24 = sphi 0, %s31
      %s25 = sphi 0, %s23
      %s26 = sphi 0, %s24
      %s27 = sphi 0, %s25
      %s28 = sphi 0, %s26
      %s40 = sphi 0, %s42
      %s43 = sphi 0, %s40
      %s44 = sphi 0, %s43
      %s60 = sphi 0, %s44
      %s66 = sphi 0, %s68
      %s69 = sphi 0, %s66
      %s70 = sphi 0, %s69
      %s86 = sphi 0, %s70
      %s90 = sphi 0, %s90
      %s92 = sphi 0, %s90
      %s93 = sphi 0, %s92
      %s107 = sphi 0, %s93
      %s111 = sphi 0, %s111
      %s113 = sphi 0, %s111
      %s114 = sphi 0, %s113
      %s128 = sphi 0, %s114
      %s132 = sphi 0, %s132
      %s134 = sphi 0, %s132
      %s135 = sphi 0, %s134
      %s149 = sphi 0, %s135
      %s153 = sphi 0, %s153
      %s155 = sphi 0, %s153
      %s156 = sphi 0, %s155
      %s170 = sphi 0, %s156
      %s174 = sphi 0, %s174
      %s176 = sphi 0, %s174
      %s177 = sphi 0, %s176
      %s191 = sphi 0, %s177
      %s195 = sphi 0, %s195
      %s197 = sphi 0, %s195
      %s198 = sphi 0, %s197
      %s212 = sphi 0, %s198
      %s216 = sphi 0, %s216
      %s218 = sphi 0, %s216
      %s219 = sphi 0, %s218
      %s233 = sphi 0, %s219
      %s239 = sphi 0, %s241
      %s242 = sphi 0, %s239
      %s243 = sphi 0, %s242
      %s259 = sphi 0, %s243
    $region4: #{denoising_mlp_forward.1} parent=1 // loop_header_branch
      %19 = sbr.rel (%p17) target = $region8
    $region5: #{denoising_mlp_forward.1} parent=1 // loop_body
      %s21 = ssub.s32 %s16, 1
      %s22 = ssub.s32 %s16, 2
      %s29 = sadd.s32 1, %s24
      %p30 = scmp.ge.s32.totalorder %s29, 4
      %s31 = scalar_select %p30, 0, %s29
      %s32 = sadd.s32 1, %s23
      %s33 = scalar_select %p30, %s32, %s23
      %p34 = scmp.ge.s32.totalorder %s33, 1
      %s35 = scalar_select %p34, 0, %s33
      %s36 = ssub.s32 %s23, %s35
      %s37 = ssub.s32 %s24, %s31
      %s38 = sor.u32 %s36, %s37
      %p39 = scmp.eq.s32.totalorder %s38, 0
      %s41 = sadd.s32 %s40, 1
      %s42 = scalar_select %p39, %s40, %s41
      %p45 = pneg %p39
      %p46 = scmp.eq.s32.totalorder %s16, 3
      %p47 = por %p45, %p46
      %p48 = scmp.ne.s32.totalorder %s40, %s43
      %p49 = scmp.eq.s32.totalorder %s16, 0
      %p50 = por %p48, %p49
      %p51 = scmp.ne.s32.totalorder %s40, %s43
      %p52 = scmp.eq.s32.totalorder %s21, 3
      %p53 = por %p51, %p52
      %p54 = scmp.ne.s32.totalorder %s43, %s44
      %p55 = scmp.eq.s32.totalorder %s21, 0
      %p56 = por %p54, %p55
      %p57 = scmp.ne.s32.totalorder %s43, %s44
      %p58 = scmp.eq.s32.totalorder %s22, 3
      %p59 = por %p57, %p58
      %p61 = scmp.ne.s32.totalorder %s44, %s60
      %p62 = scmp.eq.s32.totalorder %s22, 0
      %p63 = por %p61, %p62
      %s64 = ssub.s32 %s24, %s31
      %p65 = scmp.eq.s32.totalorder %s64, 0
      %s67 = sadd.s32 %s66, 1
      %s68 = scalar_select %p65, %s66, %s67
      %p71 = pneg %p65
      %p72 = scmp.eq.s32.totalorder %s16, 3
      %p73 = por %p71, %p72
      %p74 = scmp.ne.s32.totalorder %s66, %s69
      %p75 = scmp.eq.s32.totalorder %s16, 0
      %p76 = por %p74, %p75
      %p77 = scmp.ne.s32.totalorder %s66, %s69
      %p78 = scmp.eq.s32.totalorder %s21, 3
      %p79 = por %p77, %p78
      %p80 = scmp.ne.s32.totalorder %s69, %s70
      %p81 = scmp.eq.s32.totalorder %s21, 0
      %p82 = por %p80, %p81
      %p83 = scmp.ne.s32.totalorder %s69, %s70
      %p84 = scmp.eq.s32.totalorder %s22, 3
      %p85 = por %p83, %p84
      %p87 = scmp.ne.s32.totalorder %s70, %s86
      %p88 = scmp.eq.s32.totalorder %s22, 0
      %p89 = por %p87, %p88
      %s91 = sadd.s32 %s90, 1
      %p94 = scmp.eq.s32.totalorder %s16, 3
      %p95 = scmp.ne.s32.totalorder %s90, %s92
      %p96 = scmp.eq.s32.totalorder %s16, 0
      %p97 = por %p95, %p96
      %p98 = scmp.ne.s32.totalorder %s90, %s92
      %p99 = scmp.eq.s32.totalorder %s21, 3
      %p100 = por %p98, %p99
      %p101 = scmp.ne.s32.totalorder %s92, %s93
      %p102 = scmp.eq.s32.totalorder %s21, 0
      %p103 = por %p101, %p102
      %p104 = scmp.ne.s32.totalorder %s92, %s93
      %p105 = scmp.eq.s32.totalorder %s22, 3
      %p106 = por %p104, %p105
      %p108 = scmp.ne.s32.totalorder %s93, %s107
      %p109 = scmp.eq.s32.totalorder %s22, 0
      %p110 = por %p108, %p109
      %s112 = sadd.s32 %s111, 1
      %p115 = scmp.eq.s32.totalorder %s16, 3
      %p116 = scmp.ne.s32.totalorder %s111, %s113
      %p117 = scmp.eq.s32.totalorder %s16, 0
      %p118 = por %p116, %p117
      %p119 = scmp.ne.s32.totalorder %s111, %s113
      %p120 = scmp.eq.s32.totalorder %s21, 3
      %p121 = por %p119, %p120
      %p122 = scmp.ne.s32.totalorder %s113, %s114
      %p123 = scmp.eq.s32.totalorder %s21, 0
      %p124 = por %p122, %p123
      %p125 = scmp.ne.s32.totalorder %s113, %s114
      %p126 = scmp.eq.s32.totalorder %s22, 3
      %p127 = por %p125, %p126
      %p129 = scmp.ne.s32.totalorder %s114, %s128
      %p130 = scmp.eq.s32.totalorder %s22, 0
      %p131 = por %p129, %p130
      %s133 = sadd.s32 %s132, 1
      %p136 = scmp.eq.s32.totalorder %s16, 3
      %p137 = scmp.ne.s32.totalorder %s132, %s134
      %p138 = scmp.eq.s32.totalorder %s16, 0
      %p139 = por %p137, %p138
      %p140 = scmp.ne.s32.totalorder %s132, %s134
      %p141 = scmp.eq.s32.totalorder %s21, 3
      %p142 = por %p140, %p141
      %p143 = scmp.ne.s32.totalorder %s134, %s135
      %p144 = scmp.eq.s32.totalorder %s21, 0
      %p145 = por %p143, %p144
      %p146 = scmp.ne.s32.totalorder %s134, %s135
      %p147 = scmp.eq.s32.totalorder %s22, 3
      %p148 = por %p146, %p147
      %p150 = scmp.ne.s32.totalorder %s135, %s149
      %p151 = scmp.eq.s32.totalorder %s22, 0
      %p152 = por %p150, %p151
      %s154 = sadd.s32 %s153, 1
      %p157 = scmp.eq.s32.totalorder %s16, 3
      %p158 = scmp.ne.s32.totalorder %s153, %s155
      %p159 = scmp.eq.s32.totalorder %s16, 0
      %p160 = por %p158, %p159
      %p161 = scmp.ne.s32.totalorder %s153, %s155
      %p162 = scmp.eq.s32.totalorder %s21, 3
      %p163 = por %p161, %p162
      %p164 = scmp.ne.s32.totalorder %s155, %s156
      %p165 = scmp.eq.s32.totalorder %s21, 0
      %p166 = por %p164, %p165
      %p167 = scmp.ne.s32.totalorder %s155, %s156
      %p168 = scmp.eq.s32.totalorder %s22, 3
      %p169 = por %p167, %p168
      %p171 = scmp.ne.s32.totalorder %s156, %s170
      %p172 = scmp.eq.s32.totalorder %s22, 0
      %p173 = por %p171, %p172
      %s175 = sadd.s32 %s174, 1
      %p178 = scmp.eq.s32.totalorder %s16, 3
      %p179 = scmp.ne.s32.totalorder %s174, %s176
      %p180 = scmp.eq.s32.totalorder %s16, 0
      %p181 = por %p179, %p180
      %p182 = scmp.ne.s32.totalorder %s174, %s176
      %p183 = scmp.eq.s32.totalorder %s21, 3
      %p184 = por %p182, %p183
      %p185 = scmp.ne.s32.totalorder %s176, %s177
      %p186 = scmp.eq.s32.totalorder %s21, 0
      %p187 = por %p185, %p186
      %p188 = scmp.ne.s32.totalorder %s176, %s177
      %p189 = scmp.eq.s32.totalorder %s22, 3
      %p190 = por %p188, %p189
      %p192 = scmp.ne.s32.totalorder %s177, %s191
      %p193 = scmp.eq.s32.totalorder %s22, 0
      %p194 = por %p192, %p193
      %s196 = sadd.s32 %s195, 1
      %p199 = scmp.eq.s32.totalorder %s16, 3
      %p200 = scmp.ne.s32.totalorder %s195, %s197
      %p201 = scmp.eq.s32.totalorder %s16, 0
      %p202 = por %p200, %p201
      %p203 = scmp.ne.s32.totalorder %s195, %s197
      %p204 = scmp.eq.s32.totalorder %s21, 3
      %p205 = por %p203, %p204
      %p206 = scmp.ne.s32.totalorder %s197, %s198
      %p207 = scmp.eq.s32.totalorder %s21, 0
      %p208 = por %p206, %p207
      %p209 = scmp.ne.s32.totalorder %s197, %s198
      %p210 = scmp.eq.s32.totalorder %s22, 3
      %p211 = por %p209, %p210
      %p213 = scmp.ne.s32.totalorder %s198, %s212
      %p214 = scmp.eq.s32.totalorder %s22, 0
      %p215 = por %p213, %p214
      %s217 = sadd.s32 %s216, 1
      %p220 = scmp.eq.s32.totalorder %s16, 3
      %p221 = scmp.ne.s32.totalorder %s216, %s218
      %p222 = scmp.eq.s32.totalorder %s16, 0
      %p223 = por %p221, %p222
      %p224 = scmp.ne.s32.totalorder %s216, %s218
      %p225 = scmp.eq.s32.totalorder %s21, 3
      %p226 = por %p224, %p225
      %p227 = scmp.ne.s32.totalorder %s218, %s219
      %p228 = scmp.eq.s32.totalorder %s21, 0
      %p229 = por %p227, %p228
      %p230 = scmp.ne.s32.totalorder %s218, %s219
      %p231 = scmp.eq.s32.totalorder %s22, 3
      %p232 = por %p230, %p231
      %p234 = scmp.ne.s32.totalorder %s219, %s233
      %p235 = scmp.eq.s32.totalorder %s22, 0
      %p236 = por %p234, %p235
      %s237 = ssub.s32 %s23, %s35
      %p238 = scmp.eq.s32.totalorder %s237, 0
      %s240 = sadd.s32 %s239, 1
      %s241 = scalar_select %p238, %s239, %s240
      %p244 = pneg %p238
      %p245 = scmp.eq.s32.totalorder %s16, 3
      %p246 = por %p244, %p245
      %p247 = scmp.ne.s32.totalorder %s239, %s242
      %p248 = scmp.eq.s32.totalorder %s16, 0
      %p249 = por %p247, %p248
      %p250 = scmp.ne.s32.totalorder %s239, %s242
      %p251 = scmp.eq.s32.totalorder %s21, 3
      %p252 = por %p250, %p251
      %p253 = scmp.ne.s32.totalorder %s242, %s243
      %p254 = scmp.eq.s32.totalorder %s21, 0
      %p255 = por %p253, %p254
      %p256 = scmp.ne.s32.totalorder %s242, %s243
      %p257 = scmp.eq.s32.totalorder %s22, 3
      %p258 = por %p256, %p257
      %p260 = scmp.ne.s32.totalorder %s243, %s259
      %p261 = scmp.eq.s32.totalorder %s22, 0
      %p262 = por %p260, %p261
      %p263 = scmp.le.s32.totalorder 1, %s16
      %p264 = scmp.lt.s32.totalorder %s16, 5
      %p265 = pnand %p263, %p264
      %p266 = pneg %p265
      // Predicated region
      $region9: #{denoising_mlp_forward.1} parent=5 // pred_check
        _
      $region10: #{denoising_mlp_forward.1} parent=5 // pred_check_branch
        %268 = sbr.rel (%p265) target = $region12
      $region11: #{denoising_mlp_forward.1} parent=5 // pred_region
        %s269 = ssub.s32 %s16, 1
        // Predicated region
        $region13: #{denoising_mlp_forward.1} parent=11 // pred_check
          %p270 = pneg %p103
        $region14: #{denoising_mlp_forward.1} parent=11 // pred_check_branch
          %272 = sbr.rel (%p270) target = $region16
        $region15: #{denoising_mlp_forward.1} parent=11 // pred_region
          _
        $region16: #{denoising_mlp_forward.1} parent=11 // pred_fallthru
          _
        // Predicated region
        $region17: #{denoising_mlp_forward.1} parent=11 // pred_check
          %p273 = pneg %p124
        $region18: #{denoising_mlp_forward.1} parent=11 // pred_check_branch
          %275 = sbr.rel (%p273) target = $region20
        $region19: #{denoising_mlp_forward.1} parent=11 // pred_region
          _
        $region20: #{denoising_mlp_forward.1} parent=11 // pred_fallthru
          _
        // Predicated region
        $region21: #{denoising_mlp_forward.1} parent=11 // pred_check
          %p276 = pneg %p145
        $region22: #{denoising_mlp_forward.1} parent=11 // pred_check_branch
          %278 = sbr.rel (%p276) target = $region24
        $region23: #{denoising_mlp_forward.1} parent=11 // pred_region
          _
        $region24: #{denoising_mlp_forward.1} parent=11 // pred_fallthru
          _
        // Predicated region
        $region25: #{denoising_mlp_forward.1} parent=11 // pred_check
          %p279 = pneg %p166
        $region26: #{denoising_mlp_forward.1} parent=11 // pred_check_branch
          %281 = sbr.rel (%p279) target = $region28
        $region27: #{denoising_mlp_forward.1} parent=11 // pred_region
          _
        $region28: #{denoising_mlp_forward.1} parent=11 // pred_fallthru
          _
        // Predicated region
        $region29: #{denoising_mlp_forward.1} parent=11 // pred_check
          %p282 = pneg %p187
        $region30: #{denoising_mlp_forward.1} parent=11 // pred_check_branch
          %284 = sbr.rel (%p282) target = $region32
        $region31: #{denoising_mlp_forward.1} parent=11 // pred_region
          _
        $region32: #{denoising_mlp_forward.1} parent=11 // pred_fallthru
          _
        // Predicated region
        $region33: #{denoising_mlp_forward.1} parent=11 // pred_check
          %p285 = pneg %p208
        $region34: #{denoising_mlp_forward.1} parent=11 // pred_check_branch
          %287 = sbr.rel (%p285) target = $region36
        $region35: #{denoising_mlp_forward.1} parent=11 // pred_region
          _
        $region36: #{denoising_mlp_forward.1} parent=11 // pred_fallthru
          _
        // Predicated region
        $region37: #{denoising_mlp_forward.1} parent=11 // pred_check
          %p288 = pneg %p229
        $region38: #{denoising_mlp_forward.1} parent=11 // pred_check_branch
          %290 = sbr.rel (%p288) target = $region40
        $region39: #{denoising_mlp_forward.1} parent=11 // pred_region
          _
        $region40: #{denoising_mlp_forward.1} parent=11 // pred_fallthru
          _
      $region12: #{denoising_mlp_forward.1} parent=5 // pred_fallthru
        _
      %p291 = scmp.lt.s32.totalorder %s16, 4
      // Predicated region
      $region41: #{denoising_mlp_forward.1} parent=5 // pred_check
        %p292 = pneg %p291
      $region42: #{denoising_mlp_forward.1} parent=5 // pred_check_branch
        %294 = sbr.rel (%p292) target = $region44
      $region43: #{denoising_mlp_forward.1} parent=5 // pred_region
        // Predicated region
        $region45: #{denoising_mlp_forward.1} parent=43 // pred_check
          %p295 = pneg %p50
        $region46: #{denoising_mlp_forward.1} parent=43 // pred_check_branch
          %297 = sbr.rel (%p295) target = $region48
        $region47: #{denoising_mlp_forward.1} parent=43 // pred_region
          %s298 = smul.u32 2, %s24
          %p299 = scmp.lt.s32.totalorder %s23, 0
          %s300 = scalar_select %p299, %s23, 0
          %p301 = scmp.lt.s32.totalorder %s298, 7
          %s302 = scalar_select %p301, %s298, 7
          %s303 = smul.addr %s300, 8
          %s304 = sadd.s32 %s302, %s303
          %s305 = smul.addr %s304, 8
          %s306 = scalar_lea.vmem %s0, %s305
          %s307 = smul.u32 2, %s24
        $region48: #{denoising_mlp_forward.1} parent=43 // pred_fallthru
          _
        // Predicated region
        $region49: #{denoising_mlp_forward.1} parent=43 // pred_check
          %p308 = pneg %p76
        $region50: #{denoising_mlp_forward.1} parent=43 // pred_check_branch
          %310 = sbr.rel (%p308) target = $region52
        $region51: #{denoising_mlp_forward.1} parent=43 // pred_region
          %s311 = smul.u32 32, %s24
          %s312 = ssub.s32 125, %s311
          %p313 = scmp.lt.s32.totalorder %s312, 32
          %s314 = scalar_select %p313, %s312, 32
          %s315 = smul.u32 64, %s314
          %p316 = scmp.lt.s32.totalorder %s311, 124
          %s317 = scalar_select %p316, %s311, 124
          %s318 = smul.addr %s317, 4
          %s319 = scalar_lea.vmem %s1, %s318
          %s320 = smul.u32 32, %s24
          %s321 = ssub.s32 125, %s320
          %p322 = scmp.lt.s32.totalorder %s321, 32
          %s323 = scalar_select %p322, %s321, 32
          %s324 = smul.u32 64, %s323
        $region52: #{denoising_mlp_forward.1} parent=43 // pred_fallthru
          _
      $region44: #{denoising_mlp_forward.1} parent=5 // pred_fallthru
        _
      %p325 = scmp.le.s32.totalorder 1, %s16
      %p326 = scmp.lt.s32.totalorder %s16, 5
      %p327 = pnand %p325, %p326
      %p328 = pneg %p327
      // Predicated region
      $region53: #{denoising_mlp_forward.1} parent=5 // pred_check
        _
      $region54: #{denoising_mlp_forward.1} parent=5 // pred_check_branch
        %330 = sbr.rel (%p327) target = $region56
      $region55: #{denoising_mlp_forward.1} parent=5 // pred_region
        %s331 = ssub.s32 %s16, 1
        %s332 = smul.u32 2, %s26
        %p333 = scmp.lt.s32.totalorder %s25, 0
        %s334 = scalar_select %p333, %s25, 0
        %p335 = scmp.lt.s32.totalorder %s332, 7
        %s336 = scalar_select %p335, %s332, 7
        %s337 = smul.addr %s334, 8
        %s338 = sadd.s32 %s336, %s337
        %s339 = smul.addr %s338, 8
        %s340 = scalar_lea.vmem %s0, %s339
        %p341 = pneg %p56
        %p342 = pneg %p53
        %s343 = smul.u32 32, %s26
        %s344 = ssub.s32 125, %s343
        %p345 = scmp.lt.s32.totalorder %s344, 32
        %s346 = scalar_select %p345, %s344, 32
        %s347 = smul.u32 64, %s346
        %p348 = scmp.lt.s32.totalorder %s343, 124
        %s349 = scalar_select %p348, %s343, 124
        %s350 = smul.addr %s349, 4
        %s351 = scalar_lea.vmem %s1, %s350
        %p352 = pneg %p82
        %p353 = pneg %p79
        %p354 = pneg %p103
        %p355 = pneg %p100
        %p356 = pneg %p124
        %p357 = pneg %p121
        %p358 = pneg %p145
        %p359 = pneg %p142
        %p360 = pneg %p166
        %p361 = pneg %p163
        %p362 = pneg %p187
        %p363 = pneg %p184
        %p364 = pneg %p208
        %p365 = pneg %p205
        %p366 = pneg %p229
        %p367 = pneg %p226
        %p368 = pneg %p255
        %p369 = pneg %p252
        %s370 = smul.u32 2, %s26
        %p371 = scmp.lt.s32.totalorder %s25, 0
        %s372 = scalar_select %p371, %s25, 0
        %p373 = scmp.lt.s32.totalorder %s370, 7
        %s374 = scalar_select %p373, %s370, 7
        %s375 = smul.addr %s372, 8
        %s376 = sadd.s32 %s374, %s375
        %s377 = smul.addr %s376, 8
        %s378 = scalar_lea.vmem %s0, %s377
        %s379 = smul.u32 2, %s26
        %s380 = smul.u32 32, %s26
        %s381 = ssub.s32 125, %s380
        %p382 = scmp.lt.s32.totalorder %s381, 32
        %s383 = scalar_select %p382, %s381, 32
        %s384 = smul.u32 64, %s383
        %p385 = scmp.lt.s32.totalorder %s380, 124
        %s386 = scalar_select %p385, %s380, 124
        %s387 = smul.addr %s386, 4
        %s388 = scalar_lea.vmem %s1, %s387
        %s389 = smul.u32 32, %s26
        %s390 = ssub.s32 125, %s389
        %p391 = scmp.lt.s32.totalorder %s390, 32
        %s392 = scalar_select %p391, %s390, 32
        %s393 = smul.u32 64, %s392
        %p395 = scmp.eq.s32.totalorder %s26, 0
        // Predicated region
        $region57: #{denoising_mlp_forward.1} parent=55 // pred_check
          %p396 = pneg %p395
        $region58: #{denoising_mlp_forward.1} parent=55 // pred_check_branch
          %398 = sbr.rel (%p396) target = $region60
        $region59: #{denoising_mlp_forward.1} parent=55 // pred_region
          %v399 = vld [vmem:[%s2] sm:$0x1]
          %v401 = vlaneseq
          %v402 = vshrl.u32 %v401, 7
          %v403 = vsub.s32 0, %v402
          %v404 = vrot.slane %v399, %v403
          %vm406 = vcmask 261120
          %407 = vst.msk [vmem:[#allocation2] sm:$0xff] %vm406, %v404
        $region60: #{denoising_mlp_forward.1} parent=55 // pred_fallthru
          _
        %v408 = vld [vmem:[%s378] sm:$0xff]
        %v409 = vld [vmem:[%s378 + $0x8] sm:$0xff]
        %v410 = vld [vmem:[%s388] sm:$0xf]
        %v411 = vld [vmem:[%s388 + $0x4] sm:$0xf]
        %v412 = vld [vmem:[%s388 + $0x8] sm:$0xf]
        %v413 = vld [vmem:[%s388 + $0xc] sm:$0xf]
        %v414 = vld [vmem:[%s388 + $0x10] sm:$0xf]
        %v415 = vld [vmem:[%s388 + $0x14] sm:$0xf]
        %v416 = vld [vmem:[%s388 + $0x18] sm:$0xf]
        %v417 = vld [vmem:[%s388 + $0x1c] sm:$0xf]
        %v418 = vld [vmem:[%s388 + $0x20] sm:$0xf]
        %v419 = vld [vmem:[%s388 + $0x24] sm:$0xf]
        %v420 = vld [vmem:[%s388 + $0x28] sm:$0xf]
        %v421 = vld [vmem:[%s388 + $0x2c] sm:$0xf]
        %v422 = vld [vmem:[%s388 + $0x30] sm:$0xf]
        %v423 = vld [vmem:[%s388 + $0x34] sm:$0xf]
        %v424 = vld [vmem:[%s388 + $0x38] sm:$0xf]
        %v425 = vld [vmem:[%s388 + $0x3c] sm:$0xf]
        %v426 = vld [vmem:[%s388 + $0x40] sm:$0xf]
        %v427 = vld [vmem:[%s388 + $0x44] sm:$0xf]
        %v428 = vld [vmem:[%s388 + $0x48] sm:$0xf]
        %v429 = vld [vmem:[%s388 + $0x4c] sm:$0xf]
        %v430 = vld [vmem:[%s388 + $0x50] sm:$0xf]
        %v431 = vld [vmem:[%s388 + $0x54] sm:$0xf]
        %v432 = vld [vmem:[%s388 + $0x58] sm:$0xf]
        %v433 = vld [vmem:[%s388 + $0x5c] sm:$0xf]
        %v434 = vld [vmem:[%s388 + $0x60] sm:$0xf]
        %v435 = vld [vmem:[%s388 + $0x64] sm:$0xf]
        %v436 = vld [vmem:[%s388 + $0x68] sm:$0xf]
        %v437 = vld [vmem:[%s388 + $0x6c] sm:$0xf]
        %v438 = vld [vmem:[%s388 + $0x70] sm:$0xf]
        %v439 = vld [vmem:[%s388 + $0x74] sm:$0xf]
        %v440 = vld [vmem:[%s388 + $0x78] sm:$0xf]
        %v441 = vld [vmem:[%s388 + $0x7c] sm:$0xf]
        %s442 = smul.u32 %s26, 256
        %s443 = ssub.s32 1000, %s442
        %v444 = vlaneseq
        %v445 = vand.u32 %v444, 127
        %v446 = vadd.s32 %v445, 128
        %v447 = vstv %s443
        %vm448 = vcmp.lt.s32.totalorder %v445, %v447
        %vm449 = vcmp.lt.s32.totalorder %v446, %v447
        %v450 = vsel %vm448, %v408, 0.0
        %v451 = vsel %vm449, %v409, 0.0
        %v452 = vlaneseq
        %v453 = vshrl.u32 %v452, 7
        %v454 = vadd.s32 %v453, 8
        %v455 = vadd.s32 %v453, 16
        %v456 = vadd.s32 %v453, 24
        %v457 = vadd.s32 %v453, 32
        %v458 = vadd.s32 %v453, 40
        %v459 = vadd.s32 %v453, 48
        %v460 = vadd.s32 %v453, 56
        %v461 = vadd.s32 %v453, 64
        %v462 = vadd.s32 %v453, 72
        %v463 = vadd.s32 %v453, 80
        %v464 = vadd.s32 %v453, 88
        %v465 = vadd.s32 %v453, 96
        %v466 = vadd.s32 %v453, 104
        %v467 = vadd.s32 %v453, 112
        %v468 = vadd.s32 %v453, 120
        %v469 = vadd.s32 %v453, 128
        %v470 = vadd.s32 %v453, 136
        %v471 = vadd.s32 %v453, 144
        %v472 = vadd.s32 %v453, 152
        %v473 = vadd.s32 %v453, 160
        %v474 = vadd.s32 %v453, 168
        %v475 = vadd.s32 %v453, 176
        %v476 = vadd.s32 %v453, 184
        %v477 = vadd.s32 %v453, 192
        %v478 = vadd.s32 %v453, 200
        %v479 = vadd.s32 %v453, 208
        %v480 = vadd.s32 %v453, 216
        %v481 = vadd.s32 %v453, 224
        %v482 = vadd.s32 %v453, 232
        %v483 = vadd.s32 %v453, 240
        %v484 = vadd.s32 %v453, 248
        %vm485 = vcmp.lt.s32.totalorder %v453, %v447
        %vm486 = vcmp.lt.s32.totalorder %v454, %v447
        %vm487 = vcmp.lt.s32.totalorder %v455, %v447
        %vm488 = vcmp.lt.s32.totalorder %v456, %v447
        %vm489 = vcmp.lt.s32.totalorder %v457, %v447
        %vm490 = vcmp.lt.s32.totalorder %v458, %v447
        %vm491 = vcmp.lt.s32.totalorder %v459, %v447
        %vm492 = vcmp.lt.s32.totalorder %v460, %v447
        %vm493 = vcmp.lt.s32.totalorder %v461, %v447
        %vm494 = vcmp.lt.s32.totalorder %v462, %v447
        %vm495 = vcmp.lt.s32.totalorder %v463, %v447
        %vm496 = vcmp.lt.s32.totalorder %v464, %v447
        %vm497 = vcmp.lt.s32.totalorder %v465, %v447
        %vm498 = vcmp.lt.s32.totalorder %v466, %v447
        %vm499 = vcmp.lt.s32.totalorder %v467, %v447
        %vm500 = vcmp.lt.s32.totalorder %v468, %v447
        %vm501 = vcmp.lt.s32.totalorder %v469, %v447
        %vm502 = vcmp.lt.s32.totalorder %v470, %v447
        %vm503 = vcmp.lt.s32.totalorder %v471, %v447
        %vm504 = vcmp.lt.s32.totalorder %v472, %v447
        %vm505 = vcmp.lt.s32.totalorder %v473, %v447
        %vm506 = vcmp.lt.s32.totalorder %v474, %v447
        %vm507 = vcmp.lt.s32.totalorder %v475, %v447
        %vm508 = vcmp.lt.s32.totalorder %v476, %v447
        %vm509 = vcmp.lt.s32.totalorder %v477, %v447
        %vm510 = vcmp.lt.s32.totalorder %v478, %v447
        %vm511 = vcmp.lt.s32.totalorder %v479, %v447
        %vm512 = vcmp.lt.s32.totalorder %v480, %v447
        %vm513 = vcmp.lt.s32.totalorder %v481, %v447
        %vm514 = vcmp.lt.s32.totalorder %v482, %v447
        %vm515 = vcmp.lt.s32.totalorder %v483, %v447
        %vm516 = vcmp.lt.s32.totalorder %v484, %v447
        %vm517 = vmpackc.low %vm485, %vm485
        %vm518 = vmpackc.low %vm486, %vm486
        %vm519 = vmpackc.low %vm487, %vm487
        %vm520 = vmpackc.low %vm488, %vm488
        %vm521 = vmpackc.low %vm489, %vm489
        %vm522 = vmpackc.low %vm490, %vm490
        %vm523 = vmpackc.low %vm491, %vm491
        %vm524 = vmpackc.low %vm492, %vm492
        %vm525 = vmpackc.low %vm493, %vm493
        %vm526 = vmpackc.low %vm494, %vm494
        %vm527 = vmpackc.low %vm495, %vm495
        %vm528 = vmpackc.low %vm496, %vm496
        %vm529 = vmpackc.low %vm497, %vm497
        %vm530 = vmpackc.low %vm498, %vm498
        %vm531 = vmpackc.low %vm499, %vm499
        %vm532 = vmpackc.low %vm500, %vm500
        %vm533 = vmpackc.low %vm501, %vm501
        %vm534 = vmpackc.low %vm502, %vm502
        %vm535 = vmpackc.low %vm503, %vm503
        %vm536 = vmpackc.low %vm504, %vm504
        %vm537 = vmpackc.low %vm505, %vm505
        %vm538 = vmpackc.low %vm506, %vm506
        %vm539 = vmpackc.low %vm507, %vm507
        %vm540 = vmpackc.low %vm508, %vm508
        %vm541 = vmpackc.low %vm509, %vm509
        %vm542 = vmpackc.low %vm510, %vm510
        %vm543 = vmpackc.low %vm511, %vm511
        %vm544 = vmpackc.low %vm512, %vm512
        %vm545 = vmpackc.low %vm513, %vm513
        %vm546 = vmpackc.low %vm514, %vm514
        %vm547 = vmpackc.low %vm515, %vm515
        %vm548 = vmpackc.low %vm516, %vm516
        %v549 = vsel %vm517, %v410, 0
        %v550 = vsel %vm518, %v411, 0
        %v551 = vsel %vm519, %v412, 0
        %v552 = vsel %vm520, %v413, 0
        %v553 = vsel %vm521, %v414, 0
        %v554 = vsel %vm522, %v415, 0
        %v555 = vsel %vm523, %v416, 0
        %v556 = vsel %vm524, %v417, 0
        %v557 = vsel %vm525, %v418, 0
        %v558 = vsel %vm526, %v419, 0
        %v559 = vsel %vm527, %v420, 0
        %v560 = vsel %vm528, %v421, 0
        %v561 = vsel %vm529, %v422, 0
        %v562 = vsel %vm530, %v423, 0
        %v563 = vsel %vm531, %v424, 0
        %v564 = vsel %vm532, %v425, 0
        %v565 = vsel %vm533, %v426, 0
        %v566 = vsel %vm534, %v427, 0
        %v567 = vsel %vm535, %v428, 0
        %v568 = vsel %vm536, %v429, 0
        %v569 = vsel %vm537, %v430, 0
        %v570 = vsel %vm538, %v431, 0
        %v571 = vsel %vm539, %v432, 0
        %v572 = vsel %vm540, %v433, 0
        %v573 = vsel %vm541, %v434, 0
        %v574 = vsel %vm542, %v435, 0
        %v575 = vsel %vm543, %v436, 0
        %v576 = vsel %vm544, %v437, 0
        %v577 = vsel %vm545, %v438, 0
        %v578 = vsel %vm546, %v439, 0
        %v579 = vsel %vm547, %v440, 0
        %v580 = vsel %vm548, %v441, 0
        %v581 = vld [vmem:[#allocation2] sm:$0xff]
        %v582 = vpack.c.bf16 %v450, %v450
        %v583 = vpack.c.bf16 %v451, %v451
        %v616 = vunpack.c.l.b16 %v549
        %v617 = vunpack.c.l.b16 %v550
        %v618 = vunpack.c.l.b16 %v551
        %v619 = vunpack.c.l.b16 %v552
        %v620 = vunpack.c.l.b16 %v553
        %v621 = vunpack.c.l.b16 %v554
        %v622 = vunpack.c.l.b16 %v555
        %v623 = vunpack.c.l.b16 %v556
        %v624 = vunpack.c.l.b16 %v557
        %v625 = vunpack.c.l.b16 %v558
        %v626 = vunpack.c.l.b16 %v559
        %v627 = vunpack.c.l.b16 %v560
        %v628 = vunpack.c.l.b16 %v561
        %v629 = vunpack.c.l.b16 %v562
        %v630 = vunpack.c.l.b16 %v563
        %v631 = vunpack.c.l.b16 %v564
        %v632 = vunpack.c.l.b16 %v565
        %v633 = vunpack.c.l.b16 %v566
        %v634 = vunpack.c.l.b16 %v567
        %v635 = vunpack.c.l.b16 %v568
        %v636 = vunpack.c.l.b16 %v569
        %v637 = vunpack.c.l.b16 %v570
        %v638 = vunpack.c.l.b16 %v571
        %v639 = vunpack.c.l.b16 %v572
        %v640 = vunpack.c.l.b16 %v573
        %v641 = vunpack.c.l.b16 %v574
        %v642 = vunpack.c.l.b16 %v575
        %v643 = vunpack.c.l.b16 %v576
        %v644 = vunpack.c.l.b16 %v577
        %v645 = vunpack.c.l.b16 %v578
        %v646 = vunpack.c.l.b16 %v579
        %v647 = vunpack.c.l.b16 %v580
        %v648 = vpack.c.b16 %v617, %v616
        %v649 = vpack.c.b16 %v619, %v618
        %v650 = vpack.c.b16 %v621, %v620
        %v651 = vpack.c.b16 %v623, %v622
        %v652 = vpack.c.b16 %v625, %v624
        %v653 = vpack.c.b16 %v627, %v626
        %v654 = vpack.c.b16 %v629, %v628
        %v655 = vpack.c.b16 %v631, %v630
        %v656 = vpack.c.b16 %v633, %v632
        %v657 = vpack.c.b16 %v635, %v634
        %v658 = vpack.c.b16 %v637, %v636
        %v659 = vpack.c.b16 %v639, %v638
        %v660 = vpack.c.b16 %v641, %v640
        %v661 = vpack.c.b16 %v643, %v642
        %v662 = vpack.c.b16 %v645, %v644
        %v663 = vpack.c.b16 %v647, %v646
        %680 = vmatprep.subr.bf16.mxu0 0
        %681 = vmatpush1.bf16.msra.mxu0 %v648
        %682 = vmatprep.subr.bf16.mxu0 0
        %683 = vmatpush1.bf16.msra.mxu0 %v649
        %684 = vmatprep.subr.bf16.mxu0 0
        %685 = vmatpush1.bf16.msra.mxu0 %v650
        %686 = vmatprep.subr.bf16.mxu0 0
        %687 = vmatpush1.bf16.msra.mxu0 %v651
        %688 = vmatprep.subr.bf16.mxu0 0
        %689 = vmatpush1.bf16.msra.mxu0 %v652
        %690 = vmatprep.subr.bf16.mxu0 0
        %691 = vmatpush1.bf16.msra.mxu0 %v653
        %692 = vmatprep.subr.bf16.mxu0 0
        %693 = vmatpush1.bf16.msra.mxu0 %v654
        %694 = vmatprep.subr.bf16.mxu0 0
        %695 = vmatpush1.bf16.msra.mxu0 %v655
        %696 = vmatprep.subr.bf16.mxu0 0
        %697 = vmatpush1.bf16.msra.mxu0 %v656
        %698 = vmatprep.subr.bf16.mxu0 0
        %699 = vmatpush1.bf16.msra.mxu0 %v657
        %700 = vmatprep.subr.bf16.mxu0 0
        %701 = vmatpush1.bf16.msra.mxu0 %v658
        %702 = vmatprep.subr.bf16.mxu0 0
        %703 = vmatpush1.bf16.msra.mxu0 %v659
        %704 = vmatprep.subr.bf16.mxu0 0
        %705 = vmatpush1.bf16.msra.mxu0 %v660
        %706 = vmatprep.subr.bf16.mxu0 0
        %707 = vmatpush1.bf16.msra.mxu0 %v661
        %708 = vmatprep.subr.bf16.mxu0 0
        %709 = vmatpush1.bf16.msra.mxu0 %v662
        %710 = vmatprep.subr.bf16.mxu0 0
        %711 = vmatpush1.bf16.msra.mxu0 %v663
        %712 = vmatprep.mubr.bf16.mxu0 %v583
        %713 = vmatmul.mubr.bf16.gmra.mrb[0].mxu0 %v582
        %v714 = vpop.f32.mrb[0].mxu0
        %v715 = vadd.f32 0.0, %v714
        %v716 = vpop.f32.mrb[0].mxu0
        %v717 = vpop.f32.mrb[0].mxu0
        %v718 = vpop.f32.mrb[0].mxu0
        %719 = vdwg.mxu0
        %v720 = vadd.f32 %v581, %v715
        %vm721 = vcmask 261120
        %722 = vst.msk [vmem:[#allocation2] sm:$0xff] %vm721, %v720
        %p723 = scmp.eq.s32.totalorder %s26, 3
        // Predicated region
        $region61: #{denoising_mlp_forward.1} parent=55 // pred_check
          %p724 = pneg %p723
        $region62: #{denoising_mlp_forward.1} parent=55 // pred_check_branch
          %726 = sbr.rel (%p724) target = $region64
        $region63: #{denoising_mlp_forward.1} parent=55 // pred_region
          %v727 = vld [vmem:[#allocation2] sm:$0xff]
          %v728 = vmax.f32 %v727, 0.0
          %v729 = vpack.c.bf16 %v728, %v728
          %v730 = vld [vmem:[%s3] sm:$0xf]
          %v731 = vld [vmem:[%s3 + $0x4] sm:$0xf]
          %v732 = vld [vmem:[%s3 + $0x8] sm:$0xf]
          %v733 = vld [vmem:[%s3 + $0xc] sm:$0xf]
          %v734 = vld [vmem:[%s4] sm:$0x1]
          %v736 = vlaneseq
          %v737 = vshrl.u32 %v736, 7
          %v738 = vsub.s32 0, %v737
          %v739 = vrot.slane %v734, %v738
          %v745 = vunpack.c.l.b16 %v730
          %v746 = vunpack.c.l.b16 %v731
          %v747 = vunpack.c.l.b16 %v732
          %v748 = vunpack.c.l.b16 %v733
          %v749 = vpack.c.b16 %v746, %v745
          %v750 = vpack.c.b16 %v748, %v747
          %v754 = vsel %vm721, %v729, 0
          %756 = vmatprep.subr.bf16.mxu0 0
          %757 = vmatpush1.bf16.msra.mxu0 %v749
          %758 = vmatprep.subr.bf16.mxu0 0
          %759 = vmatpush1.bf16.msra.mxu0 %v750
          %760 = vmatprep.subr.bf16.mxu0 0
          %761 = vmatpush1.bf16.msra.mxu0 0
          %762 = vmatprep.subr.bf16.mxu0 0
          %763 = vmatpush1.bf16.msra.mxu0 0
          %764 = vmatprep.subr.bf16.mxu0 0
          %765 = vmatpush1.bf16.msra.mxu0 0
          %766 = vmatprep.subr.bf16.mxu0 0
          %767 = vmatpush1.bf16.msra.mxu0 0
          %768 = vmatprep.subr.bf16.mxu0 0
          %769 = vmatpush1.bf16.msra.mxu0 0
          %770 = vmatprep.subr.bf16.mxu0 0
          %771 = vmatpush1.bf16.msra.mxu0 0
          %772 = vmatprep.subr.bf16.mxu0 0
          %773 = vmatpush1.bf16.msra.mxu0 0
          %774 = vmatprep.subr.bf16.mxu0 0
          %775 = vmatpush1.bf16.msra.mxu0 0
          %776 = vmatprep.subr.bf16.mxu0 0
          %777 = vmatpush1.bf16.msra.mxu0 0
          %778 = vmatprep.subr.bf16.mxu0 0
          %779 = vmatpush1.bf16.msra.mxu0 0
          %780 = vmatprep.subr.bf16.mxu0 0
          %781 = vmatpush1.bf16.msra.mxu0 0
          %782 = vmatprep.subr.bf16.mxu0 0
          %783 = vmatpush1.bf16.msra.mxu0 0
          %784 = vmatprep.subr.bf16.mxu0 0
          %785 = vmatpush1.bf16.msra.mxu0 0
          %786 = vmatprep.subr.bf16.mxu0 0
          %787 = vmatpush1.bf16.msra.mxu0 0
          %788 = vmatprep.mubr.bf16.mxu0 0
          %789 = vmatmul.mubr.bf16.gmra.mrb[0].mxu0 %v754
          %v790 = vpop.f32.mrb[0].mxu0
          %v791 = vadd.f32 %v739, %v790
          %v792 = vpop.f32.mrb[0].mxu0
          %v793 = vpop.f32.mrb[0].mxu0
          %v794 = vpop.f32.mrb[0].mxu0
          %795 = vdwg.mxu0
          %v796 = vmax.f32 %v791, 0.0
          %v797 = vpack.c.bf16 %v796, %v796
          %v798 = vld [vmem:[%s5] sm:$0xf]
          %v799 = vld [vmem:[%s5 + $0x4] sm:$0xf]
          %v800 = vld [vmem:[%s5 + $0x8] sm:$0xf]
          %v801 = vld [vmem:[%s5 + $0xc] sm:$0xf]
          %v802 = vld [vmem:[%s5 + $0x10] sm:$0xf]
          %v803 = vld [vmem:[%s5 + $0x14] sm:$0xf]
          %v804 = vld [vmem:[%s5 + $0x18] sm:$0xf]
          %v805 = vld [vmem:[%s5 + $0x1c] sm:$0xf]
          %v806 = vld [vmem:[%s6] sm:$0x1]
          %v808 = vlaneseq
          %v809 = vshrl.u32 %v808, 7
          %v810 = vsub.s32 0, %v809
          %v811 = vrot.slane %v806, %v810
          %v821 = vunpack.c.l.b16 %v798
          %v822 = vunpack.c.l.b16 %v799
          %v823 = vunpack.c.l.b16 %v800
          %v824 = vunpack.c.l.b16 %v801
          %v825 = vunpack.c.l.b16 %v802
          %v826 = vunpack.c.l.b16 %v803
          %v827 = vunpack.c.l.b16 %v804
          %v828 = vunpack.c.l.b16 %v805
          %v829 = vpack.c.b16 %v822, %v821
          %v830 = vpack.c.b16 %v824, %v823
          %v831 = vpack.c.b16 %v826, %v825
          %v832 = vpack.c.b16 %v828, %v827
          %vm837 = vcmask 523264
          %v839 = vsel %vm837, %v797, 0
          %841 = vmatprep.subr.bf16.mxu0 0
          %842 = vmatpush1.bf16.msra.mxu0 %v829
          %843 = vmatprep.subr.bf16.mxu0 0
          %844 = vmatpush1.bf16.msra.mxu0 %v830
          %845 = vmatprep.subr.bf16.mxu0 0
          %846 = vmatpush1.bf16.msra.mxu0 %v831
          %847 = vmatprep.subr.bf16.mxu0 0
          %848 = vmatpush1.bf16.msra.mxu0 %v832
          %849 = vmatprep.subr.bf16.mxu0 0
          %850 = vmatpush1.bf16.msra.mxu0 0
          %851 = vmatprep.subr.bf16.mxu0 0
          %852 = vmatpush1.bf16.msra.mxu0 0
          %853 = vmatprep.subr.bf16.mxu0 0
          %854 = vmatpush1.bf16.msra.mxu0 0
          %855 = vmatprep.subr.bf16.mxu0 0
          %856 = vmatpush1.bf16.msra.mxu0 0
          %857 = vmatprep.subr.bf16.mxu0 0
          %858 = vmatpush1.bf16.msra.mxu0 0
          %859 = vmatprep.subr.bf16.mxu0 0
          %860 = vmatpush1.bf16.msra.mxu0 0
          %861 = vmatprep.subr.bf16.mxu0 0
          %862 = vmatpush1.bf16.msra.mxu0 0
          %863 = vmatprep.subr.bf16.mxu0 0
          %864 = vmatpush1.bf16.msra.mxu0 0
          %865 = vmatprep.subr.bf16.mxu0 0
          %866 = vmatpush1.bf16.msra.mxu0 0
          %867 = vmatprep.subr.bf16.mxu0 0
          %868 = vmatpush1.bf16.msra.mxu0 0
          %869 = vmatprep.subr.bf16.mxu0 0
          %870 = vmatpush1.bf16.msra.mxu0 0
          %871 = vmatprep.subr.bf16.mxu0 0
          %872 = vmatpush1.bf16.msra.mxu0 0
          %873 = vmatprep.mubr.bf16.mxu0 0
          %874 = vmatmul.mubr.bf16.gmra.mrb[0].mxu0 %v839
          %v875 = vpop.f32.mrb[0].mxu0
          %v876 = vadd.f32 %v811, %v875
          %v877 = vpop.f32.mrb[0].mxu0
          %v878 = vpop.f32.mrb[0].mxu0
          %v879 = vpop.f32.mrb[0].mxu0
          %880 = vdwg.mxu0
          %v881 = vmax.f32 %v876, 0.0
          %v882 = vpack.c.bf16 %v881, %v881
          %v883 = vld [vmem:[%s7] sm:$0xf]
          %v884 = vld [vmem:[%s7 + $0x4] sm:$0xf]
          %v885 = vld [vmem:[%s7 + $0x8] sm:$0xf]
          %v886 = vld [vmem:[%s7 + $0xc] sm:$0xf]
          %v887 = vld [vmem:[%s8] sm:$0x1]
          %v889 = vlaneseq
          %v890 = vshrl.u32 %v889, 7
          %v891 = vsub.s32 0, %v890
          %v892 = vrot.slane %v887, %v891
          %v898 = vunpack.c.l.b16 %v883
          %v899 = vunpack.c.l.b16 %v884
          %v900 = vunpack.c.l.b16 %v885
          %v901 = vunpack.c.l.b16 %v886
          %v902 = vpack.c.b16 %v899, %v898
          %v903 = vpack.c.b16 %v901, %v900
          %v907 = vsel %vm721, %v882, 0
          %909 = vmatprep.subr.bf16.mxu0 0
          %910 = vmatpush1.bf16.msra.mxu0 %v902
          %911 = vmatprep.subr.bf16.mxu0 0
          %912 = vmatpush1.bf16.msra.mxu0 %v903
          %913 = vmatprep.subr.bf16.mxu0 0
          %914 = vmatpush1.bf16.msra.mxu0 0
          %915 = vmatprep.subr.bf16.mxu0 0
          %916 = vmatpush1.bf16.msra.mxu0 0
          %917 = vmatprep.subr.bf16.mxu0 0
          %918 = vmatpush1.bf16.msra.mxu0 0
          %919 = vmatprep.subr.bf16.mxu0 0
          %920 = vmatpush1.bf16.msra.mxu0 0
          %921 = vmatprep.subr.bf16.mxu0 0
          %922 = vmatpush1.bf16.msra.mxu0 0
          %923 = vmatprep.subr.bf16.mxu0 0
          %924 = vmatpush1.bf16.msra.mxu0 0
          %925 = vmatprep.subr.bf16.mxu0 0
          %926 = vmatpush1.bf16.msra.mxu0 0
          %927 = vmatprep.subr.bf16.mxu0 0
          %928 = vmatpush1.bf16.msra.mxu0 0
          %929 = vmatprep.subr.bf16.mxu0 0
          %930 = vmatpush1.bf16.msra.mxu0 0
          %931 = vmatprep.subr.bf16.mxu0 0
          %932 = vmatpush1.bf16.msra.mxu0 0
          %933 = vmatprep.subr.bf16.mxu0 0
          %934 = vmatpush1.bf16.msra.mxu0 0
          %935 = vmatprep.subr.bf16.mxu0 0
          %936 = vmatpush1.bf16.msra.mxu0 0
          %937 = vmatprep.subr.bf16.mxu0 0
          %938 = vmatpush1.bf16.msra.mxu0 0
          %939 = vmatprep.subr.bf16.mxu0 0
          %940 = vmatpush1.bf16.msra.mxu0 0
          %941 = vmatprep.mubr.bf16.mxu0 0
          %942 = vmatmul.mubr.bf16.gmra.mrb[0].mxu0 %v907
          %v943 = vpop.f32.mrb[0].mxu0
          %v944 = vadd.f32 %v892, %v943
          %v945 = vpop.f32.mrb[0].mxu0
          %v946 = vpop.f32.mrb[0].mxu0
          %v947 = vpop.f32.mrb[0].mxu0
          %948 = vdwg.mxu0
          %vm949 = vcmask 130048
          %950 = vst.msk [vmem:[#allocation3] sm:$0xff] %vm949, %v944
        $region64: #{denoising_mlp_forward.1} parent=55 // pred_fallthru
          _
        // Predicated region
        $region65: #{denoising_mlp_forward.1} parent=55 // pred_check
          %p951 = pneg %p252
        $region66: #{denoising_mlp_forward.1} parent=55 // pred_check_branch
          %953 = sbr.rel (%p951) target = $region68
        $region67: #{denoising_mlp_forward.1} parent=55 // pred_region
          %s955 = ssub.s32 128, 128
          %956 = vsyncadd [#allocation4], %s955
          %s957 = smul.addr %s25, 128
          %s958 = scalar_lea.hbm %s9, %s957
          %s960 = sshll.u32 [#allocation3], 4
          %s961 = int_to_ptr.vmem [resolvable:$true] %s960
          %963 = dma.vmem_to_hbm [thread:$0]  %s961, 128, %s958, [#allocation4]
        $region68: #{denoising_mlp_forward.1} parent=55 // pred_fallthru
          _
        // Predicated region
        $region69: #{denoising_mlp_forward.1} parent=55 // pred_check
          %p964 = pneg %p252
        $region70: #{denoising_mlp_forward.1} parent=55 // pred_check_branch
          %966 = sbr.rel (%p964) target = $region72
        $region71: #{denoising_mlp_forward.1} parent=55 // pred_region
          %967 = dma.done [#allocation4], 128
        $region72: #{denoising_mlp_forward.1} parent=55 // pred_fallthru
          _
      $region56: #{denoising_mlp_forward.1} parent=5 // pred_fallthru
        _
      %p968 = scmp.le.s32.totalorder 2, %s16
      // Predicated region
      $region73: #{denoising_mlp_forward.1} parent=5 // pred_check
        %p969 = pneg %p968
      $region74: #{denoising_mlp_forward.1} parent=5 // pred_check_branch
        %971 = sbr.rel (%p969) target = $region76
      $region75: #{denoising_mlp_forward.1} parent=5 // pred_region
        %s972 = ssub.s32 %s16, 2
      $region76: #{denoising_mlp_forward.1} parent=5 // pred_fallthru
        _
    $region6: #{denoising_mlp_forward.1} parent=1 // loop_footer
      %s20 = sadd.s32 1, %s16
    $region7: #{denoising_mlp_forward.1} parent=1 // loop_footer_branch
      %15 = sbr.rel target = $region3
    $region8: #{denoising_mlp_forward.1} parent=1 // loop_exit
      _
    %973 = vsyncpa [#allocation4], 1
    %s974 = scalar_lea.sflag [#allocation4], 1
    %975 = vsyncpa %s974, 1

</llo_original>
